<compile_context>
chip_gen: v7x
topology: tpu7x:2x2x1
jax: 0.10.0
libtpu: 0.0.40
codegen_flags: <defaults>
</compile_context>

<pallas_src>
import math

import jax
import jax.numpy as jnp
from jax import lax
from jax.experimental import pallas as pl
from jax.experimental.pallas import tpu as pltpu

BN_EPS = 1e-5                      # nn.BatchNorm1d default
ACT_DTYPE = jnp.bfloat16           # matmul / inter-layer activation dtype


def _round_up(n, m):
    return (n + m - 1) // m * m


def _vmem_capacity_bytes():
    """Per-TensorCore VMEM capacity; conservative fallback if the query fails."""
    try:
        cap = int(pltpu.get_tpu_info().vmem_capacity_bytes)
        if cap > 0:
            return cap
    except Exception:
        pass
    return 64 << 20                # v7x per-TC VMEM (smallest of the family)


# ---------------------------------------------------------------------------
# Pallas kernels
# ---------------------------------------------------------------------------
def _make_layer_kernel(T, bt, H, b_true, unroll, carry_stats):
    """Fused (Linear_overtime -> IndRNN recurrence -> BN partials) kernel.

    The previous layer's BN is already folded into (w, b) outside the kernel,
    so the body is: bf16 MXU matmul -> in-place f32 recurrence -> masked
    per-tile BN sum / sum-of-squares partials.
    """

    def kernel(x_ref, w_ref, b_ref, u_ref, h_ref, sum_ref, sumsq_ref):
        din = x_ref.shape[-1]

        # ---- Linear_overtime: one bf16 MXU matmul for the whole tile ----
        x2 = x_ref[...].reshape(T * bt, din)                    # bf16
        y = jnp.dot(x2, w_ref[...],
                    preferred_element_type=jnp.float32) + b_ref[...]
        h_ref[...] = y.reshape(T, bt, H).astype(h_ref.dtype)    # pre-acts in place

        # ---- IndRNN recurrence: h_t = relu(y_t + u * h_{t-1}) (f32) ----
        u_b = jnp.broadcast_to(u_ref[...], (bt, H))              # hoisted broadcast
        zero = jnp.zeros((bt, H), jnp.float32)

        # NOTE: matmul and recurrence phases run back to back; a time-chunked
        # interleave is a possible further optimization, not emitted here.
        if carry_stats:
            def step(t, carry):
                h_prev, s, ss = carry
                h = jnp.maximum(h_ref[t].astype(jnp.float32) + u_b * h_prev, 0.0)
                h_ref[t] = h.astype(h_ref.dtype)                 # aligned store
                return h, s + h, ss + h * h

            if T <= 16:
                carry = (zero, zero, zero)
                for t in range(T):                               # fully unrolled
                    carry = step(t, carry)
                _, s, ss = carry
            else:
                _, s, ss = lax.fori_loop(0, T, step, (zero, zero, zero),
                                         unroll=unroll)
        else:
            # Large batch tiles: carry only h_prev; do the BN partials as one
            # vectorized reduction over the VMEM-resident block afterwards.
            def step(t, h_prev):
                h = jnp.maximum(h_ref[t].astype(jnp.float32) + u_b * h_prev, 0.0)
                h_ref[t] = h.astype(h_ref.dtype)
                return h

            if T <= 16:
                h_prev = zero
                for t in range(T):
                    h_prev = step(t, h_prev)
            else:
                lax.fori_loop(0, T, step, zero, unroll=unroll)
            hs = h_ref[...].astype(jnp.float32)
            s = jnp.sum(hs, axis=0)
            ss = jnp.sum(hs * hs, axis=0)

        # ---- masked per-tile BN partial statistics ----
        row = lax.broadcasted_iota(jnp.int32, (bt, 1), 0) + pl.program_id(0) * bt
        mask = (row < b_true).astype(jnp.float32)                # drop padded rows
        s_red = jnp.sum(s * mask, axis=0, keepdims=True)         # (1, H)
        ss_red = jnp.sum(ss * mask, axis=0, keepdims=True)       # (1, H)
        sum_ref[...] = jnp.broadcast_to(s_red, (8, H))           # aligned store
        sumsq_ref[...] = jnp.broadcast_to(ss_red, (8, H))

    return kernel


def _classifier_kernel(x_ref, w_ref, b_ref, out_ref):
    # Last layer's BN is folded into (w, b) outside the kernel.
    out_ref[...] = (jnp.dot(x_ref[...], w_ref[...],
                            preferred_element_type=jnp.float32)
                    + b_ref[...]).astype(out_ref.dtype)


# ---------------------------------------------------------------------------
# Wrappers
# ---------------------------------------------------------------------------
def indrnn_layer(x, w, b, u, *, b_true, bt, vmem_budget):
    """x: (T, B_pad, Din_pad) bf16 -> (pre-BN hidden (T,B_pad,H_pad) bf16, sum, sumsq)."""
    T, b_pad, din = x.shape
    H = w.shape[1]
    num_bt = b_pad // bt
    carry_stats = bt < 128

    if T <= 16:
        unroll = True
    else:
        unroll = next(k for k in (8, 4, 2, 1) if T % k == 0)

    kernel = _make_layer_kernel(T, bt, H, b_true, unroll, carry_stats)

    # VMEM budget: double-buffered bf16 x / h blocks + bf16 weights + f32 y temp.
    act = jnp.dtype(ACT_DTYPE).itemsize
    x_blk = T * bt * din * act
    h_blk = T * bt * H * act
    temps = T * bt * (H * 4 + din * act)
    foot = 2 * (x_blk + h_blk) + din * H * act + temps + (2 << 20)
    vmem_limit = max(min(foot, vmem_budget), 8 << 20)

    h_out, s, ss = pl.pallas_call(
        kernel,
        out_shape=(
            jax.ShapeDtypeStruct((T, b_pad, H), ACT_DTYPE),
            jax.ShapeDtypeStruct((num_bt * 8, H), jnp.float32),
            jax.ShapeDtypeStruct((num_bt * 8, H), jnp.float32),
        ),
        grid_spec=pltpu.PrefetchScalarGridSpec(
            num_scalar_prefetch=0,
            grid=(num_bt,),
            in_specs=[
                pl.BlockSpec((T, bt, din), lambda i: (0, i, 0)),
                pl.BlockSpec((din, H), lambda i: (0, 0)),
                pl.BlockSpec((1, H), lambda i: (0, 0)),
                pl.BlockSpec((1, H), lambda i: (0, 0)),
            ],
            out_specs=[
                pl.BlockSpec((T, bt, H), lambda i: (0, i, 0)),
                pl.BlockSpec((8, H), lambda i: (i, 0)),
                pl.BlockSpec((8, H), lambda i: (i, 0)),
            ],
        ),
        compiler_params=pltpu.CompilerParams(
            dimension_semantics=("parallel",),
            vmem_limit_bytes=vmem_limit,
        ),
    )(x, w, b, u)

    sum_all = s.reshape(num_bt, 8, H)[:, 0, :].sum(axis=0)       # (H_pad,)
    sumsq_all = ss.reshape(num_bt, 8, H)[:, 0, :].sum(axis=0)    # (H_pad,)
    return h_out, sum_all, sumsq_all


def classifier_apply(x, w, b):
    # Tiny (B_pad, H) x (H, C) matmul; kept as a Pallas kernel (whole arrays in
    # VMEM) with the BN fold already applied to (w, b).
    b_pad, H = x.shape
    C = w.shape[1]
    vmem = pl.BlockSpec(memory_space=pltpu.MemorySpace.VMEM)
    est = 2 * (b_pad * H * 2 + H * C * 2 + b_pad * C * 4) + (2 << 20)
    return pl.pallas_call(
        _classifier_kernel,
        out_shape=jax.ShapeDtypeStruct((b_pad, C), jnp.float32),
        in_specs=[vmem, vmem, vmem],
        out_specs=vmem,
        compiler_params=pltpu.CompilerParams(
            vmem_limit_bytes=min(max(est, 4 << 20), 48 << 20)),
    )(x, w, b)


def _pick_batch_tile(T, B, din_pad, h_pad, vmem_budget):
    """Multiple-of-16 batch tile (bf16 sublane packing) sized against VMEM and
    vreg pressure, keeping >=2 'parallel' grid steps when the batch allows."""
    b_need = _round_up(B, 16)
    bt = min(256, b_need)
    while bt > 16:
        x_blk = T * bt * din_pad * 2
        h_blk = T * bt * h_pad * 2
        temps = T * bt * (h_pad * 4 + din_pad * 2)
        foot = 2 * (x_blk + h_blk) + din_pad * h_pad * 2 + temps + (2 << 20)
        carried = (2 if bt >= 128 else 4) * bt * h_pad   # f32 words live in the loop
        if foot <= vmem_budget and carried <= 40 * 1024:
            break
        bt -= 16
    # v7x has 2 TensorCores: avoid a single grid step when the batch is big enough.
    if b_need >= 32 and _round_up(B, bt) // bt < 2:
        bt = min(bt, _round_up(b_need // 2, 16))
    return bt


def forward(x, params):
    T, B, din = x.shape
    H = params["layers"][0]["w"].shape[1]
    C = params["cw"].shape[1]

    din_pad = _round_up(din, 128)
    h_pad = _round_up(H, 128)
    c_pad = _round_up(C, 128)

    vmem_cap = _vmem_capacity_bytes()
    vmem_budget = min(int(vmem_cap * 0.72), 100 << 20)   # headroom for the compiler
    bt = _pick_batch_tile(T, B, max(din_pad, h_pad), h_pad, vmem_budget)
    b_pad = _round_up(B, bt)

    # Pad input: lanes -> din_pad (zero weight rows make this exact), batch ->
    # b_pad (padded rows masked out of BN statistics); store in bf16.
    xp = jnp.pad(x, ((0, 0), (0, b_pad - B), (0, din_pad - din))).astype(ACT_DTYPE)

    h = xp
    scale = None            # layer 0 consumes the raw input: no previous BN
    shift = None
    count = float(T * B)
    for p in params["layers"]:
        d_in = p["w"].shape[0]
        d_in_pad = _round_up(d_in, 128)

        # Fold the previous layer's BN into this layer's weights (exact, f32):
        #   W' = diag(scale) @ W ,  b' = shift @ W + b
        if scale is None:
            w_f, b_f = p["w"], p["b"]
        else:
            w_f = scale[:, None] * p["w"]
            b_f = shift.reshape(1, d_in) @ p["w"] + p["b"]

        wq = jnp.pad(w_f, ((0, d_in_pad - d_in), (0, h_pad - H))).astype(ACT_DTYPE)
        bq = jnp.pad(b_f, ((0, 0), (0, h_pad - H)))              # f32
        uq = jnp.pad(p["u"], ((0, 0), (0, h_pad - H)))           # f32

        h, s, ss = indrnn_layer(h, wq, bq, uq, b_true=B, bt=bt,
                                vmem_budget=vmem_budget)

        # Training-mode BN statistics over (T, B), expressed as a per-channel
        # scale/shift that the NEXT consumer folds into its weights.
        mean = s[:H] / count
        var = jnp.maximum(ss[:H] / count - mean * mean, 0.0)
        inv = lax.rsqrt(var + BN_EPS)
        g = p["gamma"][0]
        scale = g * inv
        shift = p["beta"][0] - mean * g * inv

    # Classifier on the last timestep, with the last BN folded into (cw, cb).
    cw_f = scale[:, None] * params["cw"]
    cb_f = shift.reshape(1, H) @ params["cw"] + params["cb"]
    cwq = jnp.pad(cw_f, ((0, h_pad - H), (0, c_pad - C))).astype(ACT_DTYPE)
    cbq = jnp.pad(cb_f, ((0, 0), (0, c_pad - C)))                # f32
    logits = classifier_apply(h[-1], cwq, cbq)
    return logits[:B, :C]


# ---------------------------------------------------------------------------
# Deterministic parameter init (mirrors IndrnnPlainnet.init_weights)
# ---------------------------------------------------------------------------
def init_params(key, input_size, hidden_size, num_layers, outputclass, seq_len):
    MAG = 2.0
    u_bound = 10.0 ** (math.log10(MAG) / seq_len)
    u_low = 10.0 ** (math.log10(1.0 / MAG) / seq_len)

    keys = jax.random.split(key, 2 * num_layers + 1)
    layers = []
    din = input_size
    for l in range(num_layers):
        kw, ku = keys[2 * l], keys[2 * l + 1]
        # kaiming_uniform_(a=8, mode='fan_in') -> bound = sqrt(6 / ((1 + a^2) * fan_in))
        bound = math.sqrt(6.0 / ((1.0 + 8.0 ** 2) * din))
        w = jax.random.uniform(kw, (din, hidden_size), jnp.float32, -bound, bound)
        b = jnp.zeros((1, hidden_size), jnp.float32)
        u = jax.random.uniform(ku, (1, hidden_size), jnp.float32, u_low, u_bound)
        gamma = jnp.ones((1, hidden_size), jnp.float32)   # norm weight -> 1
        beta = jnp.zeros((1, hidden_size), jnp.float32)   # bias -> 0
        layers.append(dict(w=w, b=b, u=u, gamma=gamma, beta=beta))
        din = hidden_size

    # classifier: kaiming_normal_ (fan_in), bias = 0
    std = math.sqrt(2.0 / hidden_size)
    cw = jax.random.normal(keys[-1], (hidden_size, outputclass), jnp.float32) * std
    cb = jnp.zeros((1, outputclass), jnp.float32)
    return dict(layers=layers, cw=cw, cb=cb)


# ---------------------------------------------------------------------------
# Pure-JAX f32 reference (same math, no Pallas) for a correctness check
# ---------------------------------------------------------------------------
def reference_forward(x, params):
    h = x
    for p in params["layers"]:
        T, B, _ = h.shape
        H = p["w"].shape[1]
        y = (h.reshape(T * B, -1) @ p["w"] + p["b"]).reshape(T, B, H)
        hprev = jnp.zeros((B, H), jnp.float32)
        hs = []
        for t in range(T):
            hprev = jnp.maximum(y[t] + p["u"] * hprev, 0.0)
            hs.append(hprev)
        hseq = jnp.stack(hs, axis=0)
        mean = hseq.mean(axis=(0, 1), keepdims=True)
        var = ((hseq - mean) ** 2).mean(axis=(0, 1), keepdims=True)
        h = ((hseq - mean) / jnp.sqrt(var + BN_EPS)
             * p["gamma"].reshape(1, 1, H) + p["beta"].reshape(1, 1, H))
    return h[-1] @ params["cw"] + params["cb"]


if __name__ == "__main__":
    # Small shapes implied by the module: (seq_len, batch, input_size)
    T, B, input_size = 8, 2, 16
    hidden_size, num_layers, outputclass = 32, 2, 10

    key = jax.random.PRNGKey(0)
    kx, kp = jax.random.split(key)
    x = jax.random.normal(kx, (T, B, input_size), jnp.float32)
    params = init_params(kp, input_size, hidden_size, num_layers, outputclass, T)

    fwd = jax.jit(forward)
    out = jax.block_until_ready(fwd(x, params))

    ref = reference_forward(x, params)
    assert out.shape == (B, outputclass)
    # bf16 MXU matmuls + bf16 inter-layer activations vs a pure-f32 reference:
    # tolerance sized for mixed precision, still tight enough to catch real bugs.
    assert jnp.allclose(out, ref, atol=1e-1, rtol=1e-1), "mismatch vs JAX reference"

    print("KERNEL_OK")
</pallas_src>

<mosaic_0001>
module attributes {stable_mosaic.version = 11 : i64} {
  func.func @kernel(%arg0: i32, %arg1: memref<8x16x128xbf16, #tpu.memory_space<vmem>>, %arg2: memref<128x128xbf16, #tpu.memory_space<vmem>>, %arg3: memref<1x128xf32, #tpu.memory_space<vmem>>, %arg4: memref<1x128xf32, #tpu.memory_space<vmem>>, %arg5: memref<8x16x128xbf16, #tpu.memory_space<vmem>>, %arg6: memref<8x128xf32, #tpu.memory_space<vmem>>, %arg7: memref<8x128xf32, #tpu.memory_space<vmem>>) attributes {dimension_semantics = [#tpu.dimension_semantics<parallel>], iteration_bounds = array<i64: 1>, scalar_prefetch = 0 : i64, scratch_operands = 0 : i64, tpu.core_type = #tpu.core_type<tc>, window_params = [{transform_indices = @transform_0, window_bounds = array<i64: 8, 16, 128>}, {pipeline_mode = #tpu.pipeline_mode<synchronous>, transform_indices = @transform_1, window_bounds = array<i64: 128, 128>}, {pipeline_mode = #tpu.pipeline_mode<synchronous>, transform_indices = @transform_2, window_bounds = array<i64: 1, 128>}, {pipeline_mode = #tpu.pipeline_mode<synchronous>, transform_indices = @transform_3, window_bounds = array<i64: 1, 128>}, {transform_indices = @transform_4, window_bounds = array<i64: 8, 16, 128>}, {transform_indices = @transform_5, window_bounds = array<i64: 8, 128>}, {transform_indices = @transform_6, window_bounds = array<i64: 8, 128>}]} {
    %c0 = arith.constant 0 : index
    %c0_0 = arith.constant 0 : index
    %c0_1 = arith.constant 0 : index
    %0 = vector.load %arg1[%c0, %c0_0, %c0_1] : memref<8x16x128xbf16, #tpu.memory_space<vmem>>, vector<8x16x128xbf16>
    %1 = vector.shape_cast %0 : vector<8x16x128xbf16> to vector<128x128xbf16>
    %c0_2 = arith.constant 0 : index
    %c0_3 = arith.constant 0 : index
    %2 = vector.load %arg2[%c0_2, %c0_3] : memref<128x128xbf16, #tpu.memory_space<vmem>>, vector<128x128xbf16>
    %cst = arith.constant dense<0.000000e+00> : vector<128x128xf32>
    %3 = tpu.matmul %1, %2, %cst {dimension_numbers = #tpu.dot_dimension_numbers<[1], [0], [0], [1], [0, 0, 1, 1], [], []>} : vector<128x128xbf16>, vector<128x128xbf16>, vector<128x128xf32> -> vector<128x128xf32>
    %c0_4 = arith.constant 0 : index
    %c0_5 = arith.constant 0 : index
    %4 = vector.load %arg3[%c0_4, %c0_5] : memref<1x128xf32, #tpu.memory_space<vmem>>, vector<1x128xf32>
    %5 = vector.broadcast %4 : vector<1x128xf32> to vector<128x128xf32>
    %6 = arith.addf %3, %5 : vector<128x128xf32>
    %7 = vector.shape_cast %6 : vector<128x128xf32> to vector<8x16x128xf32>
    %8 = arith.truncf %7 : vector<8x16x128xf32> to vector<8x16x128xbf16>
    %c0_6 = arith.constant 0 : index
    %c0_7 = arith.constant 0 : index
    %c0_8 = arith.constant 0 : index
    %9 = vector.load %arg5[%c0_6, %c0_7, %c0_8] : memref<8x16x128xbf16, #tpu.memory_space<vmem>>, vector<8x16x128xbf16>
    tpu.vector_store %arg5[%c0_6, %c0_7, %c0_8], %8 {strides = array<i32>} : memref<8x16x128xbf16, #tpu.memory_space<vmem>>, vector<8x16x128xbf16>,
    %c0_9 = arith.constant 0 : index
    %c0_10 = arith.constant 0 : index
    %10 = vector.load %arg4[%c0_9, %c0_10] : memref<1x128xf32, #tpu.memory_space<vmem>>, vector<1x128xf32>
    %11 = vector.shape_cast %10 : vector<1x128xf32> to vector<1x128xf32>
    %12 = vector.broadcast %11 : vector<1x128xf32> to vector<16x128xf32>
    %cst_11 = arith.constant 0.000000e+00 : f32
    %13 = vector.broadcast %cst_11 : f32 to vector<16x128xf32>
    %c0_12 = arith.constant 0 : index
    %c0_13 = arith.constant 0 : index
    %c0_14 = arith.constant 0 : index
    %14 = vector.load %arg5[%c0_12, %c0_13, %c0_14] : memref<8x16x128xbf16, #tpu.memory_space<vmem>>, vector<1x16x128xbf16>
    %15 = vector.shape_cast %14 : vector<1x16x128xbf16> to vector<16x128xbf16>
    %16 = arith.extf %15 : vector<16x128xbf16> to vector<16x128xf32>
    %17 = arith.mulf %12, %13 : vector<16x128xf32>
    %18 = arith.addf %16, %17 : vector<16x128xf32>
    %cst_15 = arith.constant 0.000000e+00 : f32
    %19 = vector.broadcast %cst_15 : f32 to vector<16x128xf32>
    %20 = arith.maximumf %18, %19 : vector<16x128xf32>
    %21 = arith.truncf %20 : vector<16x128xf32> to vector<16x128xbf16>
    %c0_16 = arith.constant 0 : index
    %c0_17 = arith.constant 0 : index
    %c0_18 = arith.constant 0 : index
    %22 = vector.load %arg5[%c0_16, %c0_17, %c0_18] : memref<8x16x128xbf16, #tpu.memory_space<vmem>>, vector<1x16x128xbf16>
    %23 = vector.shape_cast %22 : vector<1x16x128xbf16> to vector<16x128xbf16>
    %24 = vector.shape_cast %21 : vector<16x128xbf16> to vector<1x16x128xbf16>
    tpu.vector_store %arg5[%c0_16, %c0_17, %c0_18], %24 {strides = array<i32>} : memref<8x16x128xbf16, #tpu.memory_space<vmem>>, vector<1x16x128xbf16>,
    %25 = arith.addf %13, %20 : vector<16x128xf32>
    %26 = arith.mulf %20, %20 : vector<16x128xf32>
    %27 = arith.addf %13, %26 : vector<16x128xf32>
    %c1 = arith.constant 1 : index
    %c0_19 = arith.constant 0 : index
    %c0_20 = arith.constant 0 : index
    %28 = vector.load %arg5[%c1, %c0_19, %c0_20] : memref<8x16x128xbf16, #tpu.memory_space<vmem>>, vector<1x16x128xbf16>
    %29 = vector.shape_cast %28 : vector<1x16x128xbf16> to vector<16x128xbf16>
    %30 = arith.extf %29 : vector<16x128xbf16> to vector<16x128xf32>
    %31 = arith.mulf %12, %20 : vector<16x128xf32>
    %32 = arith.addf %30, %31 : vector<16x128xf32>
    %cst_21 = arith.constant 0.000000e+00 : f32
    %33 = vector.broadcast %cst_21 : f32 to vector<16x128xf32>
    %34 = arith.maximumf %32, %33 : vector<16x128xf32>
    %35 = arith.truncf %34 : vector<16x128xf32> to vector<16x128xbf16>
    %c1_22 = arith.constant 1 : index
    %c0_23 = arith.constant 0 : index
    %c0_24 = arith.constant 0 : index
    %36 = vector.load %arg5[%c1_22, %c0_23, %c0_24] : memref<8x16x128xbf16, #tpu.memory_space<vmem>>, vector<1x16x128xbf16>
    %37 = vector.shape_cast %36 : vector<1x16x128xbf16> to vector<16x128xbf16>
    %38 = vector.shape_cast %35 : vector<16x128xbf16> to vector<1x16x128xbf16>
    tpu.vector_store %arg5[%c1_22, %c0_23, %c0_24], %38 {strides = array<i32>} : memref<8x16x128xbf16, #tpu.memory_space<vmem>>, vector<1x16x128xbf16>,
    %39 = arith.addf %25, %34 : vector<16x128xf32>
    %40 = arith.mulf %34, %34 : vector<16x128xf32>
    %41 = arith.addf %27, %40 : vector<16x128xf32>
    %c2 = arith.constant 2 : index
    %c0_25 = arith.constant 0 : index
    %c0_26 = arith.constant 0 : index
    %42 = vector.load %arg5[%c2, %c0_25, %c0_26] : memref<8x16x128xbf16, #tpu.memory_space<vmem>>, vector<1x16x128xbf16>
    %43 = vector.shape_cast %42 : vector<1x16x128xbf16> to vector<16x128xbf16>
    %44 = arith.extf %43 : vector<16x128xbf16> to vector<16x128xf32>
    %45 = arith.mulf %12, %34 : vector<16x128xf32>
    %46 = arith.addf %44, %45 : vector<16x128xf32>
    %cst_27 = arith.constant 0.000000e+00 : f32
    %47 = vector.broadcast %cst_27 : f32 to vector<16x128xf32>
    %48 = arith.maximumf %46, %47 : vector<16x128xf32>
    %49 = arith.truncf %48 : vector<16x128xf32> to vector<16x128xbf16>
    %c2_28 = arith.constant 2 : index
    %c0_29 = arith.constant 0 : index
    %c0_30 = arith.constant 0 : index
    %50 = vector.load %arg5[%c2_28, %c0_29, %c0_30] : memref<8x16x128xbf16, #tpu.memory_space<vmem>>, vector<1x16x128xbf16>
    %51 = vector.shape_cast %50 : vector<1x16x128xbf16> to vector<16x128xbf16>
    %52 = vector.shape_cast %49 : vector<16x128xbf16> to vector<1x16x128xbf16>
    tpu.vector_store %arg5[%c2_28, %c0_29, %c0_30], %52 {strides = array<i32>} : memref<8x16x128xbf16, #tpu.memory_space<vmem>>, vector<1x16x128xbf16>,
    %53 = arith.addf %39, %48 : vector<16x128xf32>
    %54 = arith.mulf %48, %48 : vector<16x128xf32>
    %55 = arith.addf %41, %54 : vector<16x128xf32>
    %c3 = arith.constant 3 : index
    %c0_31 = arith.constant 0 : index
    %c0_32 = arith.constant 0 : index
    %56 = vector.load %arg5[%c3, %c0_31, %c0_32] : memref<8x16x128xbf16, #tpu.memory_space<vmem>>, vector<1x16x128xbf16>
    %57 = vector.shape_cast %56 : vector<1x16x128xbf16> to vector<16x128xbf16>
    %58 = arith.extf %57 : vector<16x128xbf16> to vector<16x128xf32>
    %59 = arith.mulf %12, %48 : vector<16x128xf32>
    %60 = arith.addf %58, %59 : vector<16x128xf32>
    %cst_33 = arith.constant 0.000000e+00 : f32
    %61 = vector.broadcast %cst_33 : f32 to vector<16x128xf32>
    %62 = arith.maximumf %60, %61 : vector<16x128xf32>
    %63 = arith.truncf %62 : vector<16x128xf32> to vector<16x128xbf16>
    %c3_34 = arith.constant 3 : index
    %c0_35 = arith.constant 0 : index
    %c0_36 = arith.constant 0 : index
    %64 = vector.load %arg5[%c3_34, %c0_35, %c0_36] : memref<8x16x128xbf16, #tpu.memory_space<vmem>>, vector<1x16x128xbf16>
    %65 = vector.shape_cast %64 : vector<1x16x128xbf16> to vector<16x128xbf16>
    %66 = vector.shape_cast %63 : vector<16x128xbf16> to vector<1x16x128xbf16>
    tpu.vector_store %arg5[%c3_34, %c0_35, %c0_36], %66 {strides = array<i32>} : memref<8x16x128xbf16, #tpu.memory_space<vmem>>, vector<1x16x128xbf16>,
    %67 = arith.addf %53, %62 : vector<16x128xf32>
    %68 = arith.mulf %62, %62 : vector<16x128xf32>
    %69 = arith.addf %55, %68 : vector<16x128xf32>
    %c4 = arith.constant 4 : index
    %c0_37 = arith.constant 0 : index
    %c0_38 = arith.constant 0 : index
    %70 = vector.load %arg5[%c4, %c0_37, %c0_38] : memref<8x16x128xbf16, #tpu.memory_space<vmem>>, vector<1x16x128xbf16>
    %71 = vector.shape_cast %70 : vector<1x16x128xbf16> to vector<16x128xbf16>
    %72 = arith.extf %71 : vector<16x128xbf16> to vector<16x128xf32>
    %73 = arith.mulf %12, %62 : vector<16x128xf32>
    %74 = arith.addf %72, %73 : vector<16x128xf32>
    %cst_39 = arith.constant 0.000000e+00 : f32
    %75 = vector.broadcast %cst_39 : f32 to vector<16x128xf32>
    %76 = arith.maximumf %74, %75 : vector<16x128xf32>
    %77 = arith.truncf %76 : vector<16x128xf32> to vector<16x128xbf16>
    %c4_40 = arith.constant 4 : index
    %c0_41 = arith.constant 0 : index
    %c0_42 = arith.constant 0 : index
    %78 = vector.load %arg5[%c4_40, %c0_41, %c0_42] : memref<8x16x128xbf16, #tpu.memory_space<vmem>>, vector<1x16x128xbf16>
    %79 = vector.shape_cast %78 : vector<1x16x128xbf16> to vector<16x128xbf16>
    %80 = vector.shape_cast %77 : vector<16x128xbf16> to vector<1x16x128xbf16>
    tpu.vector_store %arg5[%c4_40, %c0_41, %c0_42], %80 {strides = array<i32>} : memref<8x16x128xbf16, #tpu.memory_space<vmem>>, vector<1x16x128xbf16>,
    %81 = arith.addf %67, %76 : vector<16x128xf32>
    %82 = arith.mulf %76, %76 : vector<16x128xf32>
    %83 = arith.addf %69, %82 : vector<16x128xf32>
    %c5 = arith.constant 5 : index
    %c0_43 = arith.constant 0 : index
    %c0_44 = arith.constant 0 : index
    %84 = vector.load %arg5[%c5, %c0_43, %c0_44] : memref<8x16x128xbf16, #tpu.memory_space<vmem>>, vector<1x16x128xbf16>
    %85 = vector.shape_cast %84 : vector<1x16x128xbf16> to vector<16x128xbf16>
    %86 = arith.extf %85 : vector<16x128xbf16> to vector<16x128xf32>
    %87 = arith.mulf %12, %76 : vector<16x128xf32>
    %88 = arith.addf %86, %87 : vector<16x128xf32>
    %cst_45 = arith.constant 0.000000e+00 : f32
    %89 = vector.broadcast %cst_45 : f32 to vector<16x128xf32>
    %90 = arith.maximumf %88, %89 : vector<16x128xf32>
    %91 = arith.truncf %90 : vector<16x128xf32> to vector<16x128xbf16>
    %c5_46 = arith.constant 5 : index
    %c0_47 = arith.constant 0 : index
    %c0_48 = arith.constant 0 : index
    %92 = vector.load %arg5[%c5_46, %c0_47, %c0_48] : memref<8x16x128xbf16, #tpu.memory_space<vmem>>, vector<1x16x128xbf16>
    %93 = vector.shape_cast %92 : vector<1x16x128xbf16> to vector<16x128xbf16>
    %94 = vector.shape_cast %91 : vector<16x128xbf16> to vector<1x16x128xbf16>
    tpu.vector_store %arg5[%c5_46, %c0_47, %c0_48], %94 {strides = array<i32>} : memref<8x16x128xbf16, #tpu.memory_space<vmem>>, vector<1x16x128xbf16>,
    %95 = arith.addf %81, %90 : vector<16x128xf32>
    %96 = arith.mulf %90, %90 : vector<16x128xf32>
    %97 = arith.addf %83, %96 : vector<16x128xf32>
    %c6 = arith.constant 6 : index
    %c0_49 = arith.constant 0 : index
    %c0_50 = arith.constant 0 : index
    %98 = vector.load %arg5[%c6, %c0_49, %c0_50] : memref<8x16x128xbf16, #tpu.memory_space<vmem>>, vector<1x16x128xbf16>
    %99 = vector.shape_cast %98 : vector<1x16x128xbf16> to vector<16x128xbf16>
    %100 = arith.extf %99 : vector<16x128xbf16> to vector<16x128xf32>
    %101 = arith.mulf %12, %90 : vector<16x128xf32>
    %102 = arith.addf %100, %101 : vector<16x128xf32>
    %cst_51 = arith.constant 0.000000e+00 : f32
    %103 = vector.broadcast %cst_51 : f32 to vector<16x128xf32>
    %104 = arith.maximumf %102, %103 : vector<16x128xf32>
    %105 = arith.truncf %104 : vector<16x128xf32> to vector<16x128xbf16>
    %c6_52 = arith.constant 6 : index
    %c0_53 = arith.constant 0 : index
    %c0_54 = arith.constant 0 : index
    %106 = vector.load %arg5[%c6_52, %c0_53, %c0_54] : memref<8x16x128xbf16, #tpu.memory_space<vmem>>, vector<1x16x128xbf16>
    %107 = vector.shape_cast %106 : vector<1x16x128xbf16> to vector<16x128xbf16>
    %108 = vector.shape_cast %105 : vector<16x128xbf16> to vector<1x16x128xbf16>
    tpu.vector_store %arg5[%c6_52, %c0_53, %c0_54], %108 {strides = array<i32>} : memref<8x16x128xbf16, #tpu.memory_space<vmem>>, vector<1x16x128xbf16>,
    %109 = arith.addf %95, %104 : vector<16x128xf32>
    %110 = arith.mulf %104, %104 : vector<16x128xf32>
    %111 = arith.addf %97, %110 : vector<16x128xf32>
    %c7 = arith.constant 7 : index
    %c0_55 = arith.constant 0 : index
    %c0_56 = arith.constant 0 : index
    %112 = vector.load %arg5[%c7, %c0_55, %c0_56] : memref<8x16x128xbf16, #tpu.memory_space<vmem>>, vector<1x16x128xbf16>
    %113 = vector.shape_cast %112 : vector<1x16x128xbf16> to vector<16x128xbf16>
    %114 = arith.extf %113 : vector<16x128xbf16> to vector<16x128xf32>
    %115 = arith.mulf %12, %104 : vector<16x128xf32>
    %116 = arith.addf %114, %115 : vector<16x128xf32>
    %cst_57 = arith.constant 0.000000e+00 : f32
    %117 = vector.broadcast %cst_57 : f32 to vector<16x128xf32>
    %118 = arith.maximumf %116, %117 : vector<16x128xf32>
    %119 = arith.truncf %118 : vector<16x128xf32> to vector<16x128xbf16>
    %c7_58 = arith.constant 7 : index
    %c0_59 = arith.constant 0 : index
    %c0_60 = arith.constant 0 : index
    %120 = vector.load %arg5[%c7_58, %c0_59, %c0_60] : memref<8x16x128xbf16, #tpu.memory_space<vmem>>, vector<1x16x128xbf16>
    %121 = vector.shape_cast %120 : vector<1x16x128xbf16> to vector<16x128xbf16>
    %122 = vector.shape_cast %119 : vector<16x128xbf16> to vector<1x16x128xbf16>
    tpu.vector_store %arg5[%c7_58, %c0_59, %c0_60], %122 {strides = array<i32>} : memref<8x16x128xbf16, #tpu.memory_space<vmem>>, vector<1x16x128xbf16>,
    %123 = arith.addf %109, %118 : vector<16x128xf32>
    %124 = arith.mulf %118, %118 : vector<16x128xf32>
    %125 = arith.addf %111, %124 : vector<16x128xf32>
    %126 = tpu.iota {dimensions = array<i32: 0>} : vector<16x1xi32>
    %c16_i32 = arith.constant 16 : i32
    %127 = arith.muli %arg0, %c16_i32 : i32
    %128 = vector.broadcast %127 : i32 to vector<16x1xi32>
    %129 = arith.addi %126, %128 : vector<16x1xi32>
    %c2_i32 = arith.constant 2 : i32
    %130 = vector.broadcast %c2_i32 : i32 to vector<16x1xi32>
    %131 = arith.cmpi slt, %129, %130 : vector<16x1xi32>
    %132 = arith.extui %131 : vector<16x1xi1> to vector<16x1xi32>
    %133 = arith.sitofp %132 : vector<16x1xi32> to vector<16x1xf32>
    %134 = vector.broadcast %133 : vector<16x1xf32> to vector<16x128xf32>
    %135 = arith.mulf %123, %134 : vector<16x128xf32>
    %cst_61 = arith.constant dense<0.000000e+00> : vector<128xf32>
    %136 = vector.multi_reduction <add>, %135, %cst_61 [0] : vector<16x128xf32> to vector<128xf32>
    %137 = vector.shape_cast %136 : vector<128xf32> to vector<1x128xf32>
    %138 = vector.broadcast %133 : vector<16x1xf32> to vector<16x128xf32>
    %139 = arith.mulf %125, %138 : vector<16x128xf32>
    %cst_62 = arith.constant dense<0.000000e+00> : vector<128xf32>
    %140 = vector.multi_reduction <add>, %139, %cst_62 [0] : vector<16x128xf32> to vector<128xf32>
    %141 = vector.shape_cast %140 : vector<128xf32> to vector<1x128xf32>
    %142 = vector.shape_cast %137 : vector<1x128xf32> to vector<1x128xf32>
    %143 = vector.broadcast %142 : vector<1x128xf32> to vector<8x128xf32>
    %c0_63 = arith.constant 0 : index
    %c0_64 = arith.constant 0 : index
    %144 = vector.load %arg6[%c0_63, %c0_64] : memref<8x128xf32, #tpu.memory_space<vmem>>, vector<8x128xf32>
    tpu.vector_store %arg6[%c0_63, %c0_64], %143 {strides = array<i32>} : memref<8x128xf32, #tpu.memory_space<vmem>>, vector<8x128xf32>,
    %145 = vector.shape_cast %141 : vector<1x128xf32> to vector<1x128xf32>
    %146 = vector.broadcast %145 : vector<1x128xf32> to vector<8x128xf32>
    %c0_65 = arith.constant 0 : index
    %c0_66 = arith.constant 0 : index
    %147 = vector.load %arg7[%c0_65, %c0_66] : memref<8x128xf32, #tpu.memory_space<vmem>>, vector<8x128xf32>
    tpu.vector_store %arg7[%c0_65, %c0_66], %146 {strides = array<i32>} : memref<8x128xf32, #tpu.memory_space<vmem>>, vector<8x128xf32>,
    return
  }
  func.func @transform_0(%arg0: i32) -> (i32, i32, i32) {
    %c0_i32 = arith.constant 0 : i32
    %c0_i32_0 = arith.constant 0 : i32
    %c0_i32_1 = arith.constant 0 : i32
    return %c0_i32, %arg0, %c0_i32_0 : i32, i32, i32
  }
  func.func @transform_1(%arg0: i32) -> (i32, i32) {
    %c0_i32 = arith.constant 0 : i32
    %c0_i32_0 = arith.constant 0 : i32
    %c0_i32_1 = arith.constant 0 : i32
    return %c0_i32, %c0_i32_0 : i32, i32
  }
  func.func @transform_2(%arg0: i32) -> (i32, i32) {
    %c0_i32 = arith.constant 0 : i32
    %c0_i32_0 = arith.constant 0 : i32
    %c0_i32_1 = arith.constant 0 : i32
    return %c0_i32, %c0_i32_0 : i32, i32
  }
  func.func @transform_3(%arg0: i32) -> (i32, i32) {
    %c0_i32 = arith.constant 0 : i32
    %c0_i32_0 = arith.constant 0 : i32
    %c0_i32_1 = arith.constant 0 : i32
    return %c0_i32, %c0_i32_0 : i32, i32
  }
  func.func @transform_4(%arg0: i32) -> (i32, i32, i32) {
    %c0_i32 = arith.constant 0 : i32
    %c0_i32_0 = arith.constant 0 : i32
    %c0_i32_1 = arith.constant 0 : i32
    return %c0_i32, %arg0, %c0_i32_0 : i32, i32, i32
  }
  func.func @transform_5(%arg0: i32) -> (i32, i32) {
    %c0_i32 = arith.constant 0 : i32
    %c0_i32_0 = arith.constant 0 : i32
    return %arg0, %c0_i32 : i32, i32
  }
  func.func @transform_6(%arg0: i32) -> (i32, i32) {
    %c0_i32 = arith.constant 0 : i32
    %c0_i32_0 = arith.constant 0 : i32
    return %arg0, %c0_i32 : i32, i32
  }
}

module attributes {stable_mosaic.version = 11 : i64} {
  func.func @_classifier_kernel(%arg0: memref<16x128xbf16, #tpu.memory_space<vmem>>, %arg1: memref<128x128xbf16, #tpu.memory_space<vmem>>, %arg2: memref<1x128xf32, #tpu.memory_space<vmem>>, %arg3: memref<16x128xf32, #tpu.memory_space<vmem>>) attributes {dimension_semantics = [], scalar_prefetch = 0 : i64, scratch_operands = 0 : i64, tpu.core_type = #tpu.core_type<tc>} {
    %c0 = arith.constant 0 : index
    %c0_0 = arith.constant 0 : index
    %0 = vector.load %arg0[%c0, %c0_0] : memref<16x128xbf16, #tpu.memory_space<vmem>>, vector<16x128xbf16>
    %c0_1 = arith.constant 0 : index
    %c0_2 = arith.constant 0 : index
    %1 = vector.load %arg1[%c0_1, %c0_2] : memref<128x128xbf16, #tpu.memory_space<vmem>>, vector<128x128xbf16>
    %cst = arith.constant dense<0.000000e+00> : vector<16x128xf32>
    %2 = tpu.matmul %0, %1, %cst {dimension_numbers = #tpu.dot_dimension_numbers<[1], [0], [0], [1], [0, 0, 1, 1], [], []>} : vector<16x128xbf16>, vector<128x128xbf16>, vector<16x128xf32> -> vector<16x128xf32>
    %c0_3 = arith.constant 0 : index
    %c0_4 = arith.constant 0 : index
    %3 = vector.load %arg2[%c0_3, %c0_4] : memref<1x128xf32, #tpu.memory_space<vmem>>, vector<1x128xf32>
    %4 = vector.broadcast %3 : vector<1x128xf32> to vector<16x128xf32>
    %5 = arith.addf %2, %4 : vector<16x128xf32>
    %c0_5 = arith.constant 0 : index
    %c0_6 = arith.constant 0 : index
    %6 = vector.load %arg3[%c0_5, %c0_6] : memref<16x128xf32, #tpu.memory_space<vmem>>, vector<16x128xf32>
    tpu.vector_store %arg3[%c0_5, %c0_6], %5 {strides = array<i32>} : memref<16x128xf32, #tpu.memory_space<vmem>>, vector<16x128xf32>,
    return
  }
}

</mosaic_0001>

<llo_original>
// kernel: forward.5
$region0: #{forward.5}
  #allocation0 [shape = 'u32[]', space=smem, size = 0x4, offset = 0x4, fixed_abs, tag = 'smem constant byte address 0x4 - core index']
  #allocation1 [shape = 'u32[144,128]{1,0:T(1,128)}', space=vmem, size = 0x12000, scoped, tag = 'internal scratch']
  %s0 = inlined_call_operand.vmem [shape: bf16[16,128], index: 0, kind: input, shape index: {}]
  %s1 = inlined_call_operand.vmem [shape: bf16[128,128], index: 1, kind: input, shape index: {}]
  %s2 = inlined_call_operand.vmem [shape: f32[1,128], index: 2, kind: input, shape index: {}]
  %s3 = inlined_call_operand.vmem [shape: f32[16,128], index: 3, kind: output, shape index: {}]
  %s4 = sld [smem:[#allocation0]]
  $region22: #{forward.5} parent=0
    _
  %s6 = ssub.s32 1, %s4
  %s7 = scalar_select 0, %s6, %s4
  // Predicated region
  $region2: #{forward.5} parent=0 // pred_check
    _
  $region3: #{forward.5} parent=0 // pred_check_branch
    %9 = sbr.rel (0) target = $region5
  $region4: #{forward.5} parent=0 // pred_region
    _
  $region5: #{forward.5} parent=0 // pred_fallthru
    _
  // Predicated region
  $region6: #{forward.5} parent=0 // pred_check
    _
  $region7: #{forward.5} parent=0 // pred_check_branch
    %11 = sbr.rel (0) target = $region9
  $region8: #{forward.5} parent=0 // pred_region
    _
  $region9: #{forward.5} parent=0 // pred_fallthru
    _
  // Predicated region
  $region10: #{forward.5} parent=0 // pred_check
    _
  $region11: #{forward.5} parent=0 // pred_check_branch
    %13 = sbr.rel (0) target = $region13
  $region12: #{forward.5} parent=0 // pred_region
    _
  $region13: #{forward.5} parent=0 // pred_fallthru
    _
  %v15 = vld [vmem:[%s0] sm:$0xf]
  %v16 = vld [vmem:[%s0 + $0x4] sm:$0xf]
  %v17 = vld [vmem:[%s1] sm:$0xf]
  %v18 = vld [vmem:[%s1 + $0x4] sm:$0xf]
  %v19 = vld [vmem:[%s1 + $0x8] sm:$0xf]
  %v20 = vld [vmem:[%s1 + $0xc] sm:$0xf]
  %v21 = vld [vmem:[%s1 + $0x10] sm:$0xf]
  %v22 = vld [vmem:[%s1 + $0x14] sm:$0xf]
  %v23 = vld [vmem:[%s1 + $0x18] sm:$0xf]
  %v24 = vld [vmem:[%s1 + $0x1c] sm:$0xf]
  %v25 = vld [vmem:[%s1 + $0x20] sm:$0xf]
  %v26 = vld [vmem:[%s1 + $0x24] sm:$0xf]
  %v27 = vld [vmem:[%s1 + $0x28] sm:$0xf]
  %v28 = vld [vmem:[%s1 + $0x2c] sm:$0xf]
  %v29 = vld [vmem:[%s1 + $0x30] sm:$0xf]
  %v30 = vld [vmem:[%s1 + $0x34] sm:$0xf]
  %v31 = vld [vmem:[%s1 + $0x38] sm:$0xf]
  %v32 = vld [vmem:[%s1 + $0x3c] sm:$0xf]
  %v33 = vld [vmem:[%s2] sm:$0x1]
  %v35 = vlaneseq
  %v36 = vshrl.u32 %v35, 7
  %v37 = vsub.s32 0, %v36
  %v38 = vrot.slane %v33, %v37
  %v42 = vunpack.c.l.b16 %v15
  %v43 = vunpack.c.l.b16 %v16
  %v44 = vpack.c.b16 %v43, %v42
  %v62 = vunpack.c.l.b16 %v17
  %v63 = vunpack.c.l.b16 %v18
  %v64 = vunpack.c.l.b16 %v19
  %v65 = vunpack.c.l.b16 %v20
  %v66 = vunpack.c.l.b16 %v21
  %v67 = vunpack.c.l.b16 %v22
  %v68 = vunpack.c.l.b16 %v23
  %v69 = vunpack.c.l.b16 %v24
  %v70 = vunpack.c.l.b16 %v25
  %v71 = vunpack.c.l.b16 %v26
  %v72 = vunpack.c.l.b16 %v27
  %v73 = vunpack.c.l.b16 %v28
  %v74 = vunpack.c.l.b16 %v29
  %v75 = vunpack.c.l.b16 %v30
  %v76 = vunpack.c.l.b16 %v31
  %v77 = vunpack.c.l.b16 %v32
  %v78 = vpack.c.b16 %v63, %v62
  %v79 = vpack.c.b16 %v65, %v64
  %v80 = vpack.c.b16 %v67, %v66
  %v81 = vpack.c.b16 %v69, %v68
  %v82 = vpack.c.b16 %v71, %v70
  %v83 = vpack.c.b16 %v73, %v72
  %v84 = vpack.c.b16 %v75, %v74
  %v85 = vpack.c.b16 %v77, %v76
  %94 = vmatprep.subr.bf16.mxu0 0
  %95 = vmatpush1.bf16.msra.mxu0 %v78
  %96 = vmatprep.subr.bf16.mxu0 0
  %97 = vmatpush1.bf16.msra.mxu0 %v79
  %98 = vmatprep.subr.bf16.mxu0 0
  %99 = vmatpush1.bf16.msra.mxu0 %v80
  %100 = vmatprep.subr.bf16.mxu0 0
  %101 = vmatpush1.bf16.msra.mxu0 %v81
  %102 = vmatprep.subr.bf16.mxu0 0
  %103 = vmatpush1.bf16.msra.mxu0 %v82
  %104 = vmatprep.subr.bf16.mxu0 0
  %105 = vmatpush1.bf16.msra.mxu0 %v83
  %106 = vmatprep.subr.bf16.mxu0 0
  %107 = vmatpush1.bf16.msra.mxu0 %v84
  %108 = vmatprep.subr.bf16.mxu0 0
  %109 = vmatpush1.bf16.msra.mxu0 %v85
  %110 = vmatprep.subr.bf16.mxu0 0
  %111 = vmatpush1.bf16.msra.mxu0 0
  %112 = vmatprep.subr.bf16.mxu0 0
  %113 = vmatpush1.bf16.msra.mxu0 0
  %114 = vmatprep.subr.bf16.mxu0 0
  %115 = vmatpush1.bf16.msra.mxu0 0
  %116 = vmatprep.subr.bf16.mxu0 0
  %117 = vmatpush1.bf16.msra.mxu0 0
  %118 = vmatprep.subr.bf16.mxu0 0
  %119 = vmatpush1.bf16.msra.mxu0 0
  %120 = vmatprep.subr.bf16.mxu0 0
  %121 = vmatpush1.bf16.msra.mxu0 0
  %122 = vmatprep.subr.bf16.mxu0 0
  %123 = vmatpush1.bf16.msra.mxu0 0
  %124 = vmatprep.subr.bf16.mxu0 0
  %125 = vmatpush1.bf16.msra.mxu0 0
  %126 = vmatprep.mubr.bf16.mxu0 0
  %127 = vmatmul.mubr.bf16.gmra.mrb[0].mxu0 %v44
  %v128 = vpop.f32.mrb[0].mxu0
  %v129 = vadd.f32 %v38, %v128
  %v130 = vpop.f32.mrb[0].mxu0
  %v131 = vpop.f32.mrb[0].mxu0
  %v132 = vadd.f32 %v38, %v131
  %v133 = vpop.f32.mrb[0].mxu0
  %134 = vdwg.mxu0
  %135 = vst [vmem:[%s3] sm:$0xff] %v129
  %136 = vst [vmem:[%s3 + $0x8] sm:$0xff] %v132
  // Predicated region
  $region14: #{forward.5} parent=0 // pred_check
    _
  $region15: #{forward.5} parent=0 // pred_check_branch
    %138 = sbr.rel (0) target = $region17
  $region16: #{forward.5} parent=0 // pred_region
    _
  $region17: #{forward.5} parent=0 // pred_fallthru
    _
  // Predicated region
  $region18: #{forward.5} parent=0 // pred_check
    _
  $region19: #{forward.5} parent=0 // pred_check_branch
    %140 = sbr.rel (0) target = $region21
  $region20: #{forward.5} parent=0 // pred_region
    _
  $region21: #{forward.5} parent=0 // pred_fallthru
    _

// kernel: forward.3
$region0: #{forward.3}
  #allocation0 [shape = 'u32[]', space=smem, size = 0x4, offset = 0x4, fixed_abs, tag = 'smem constant byte address 0x4 - core index']
  #allocation1 [shape = 'u32[144,128]{1,0:T(1,128)}', space=vmem, size = 0x12000, scoped, tag = 'internal scratch']
  %s0 = inlined_call_operand.vmem [shape: bf16[8,16,128], index: 0, kind: input, shape index: {}]
  %s1 = inlined_call_operand.vmem [shape: bf16[128,128], index: 1, kind: input, shape index: {}]
  %s2 = inlined_call_operand.vmem [shape: f32[1,128], index: 2, kind: input, shape index: {}]
  %s3 = inlined_call_operand.vmem [shape: f32[1,128], index: 3, kind: input, shape index: {}]
  %s4 = inlined_call_operand.vmem [shape: bf16[8,16,128], index: 4, kind: output, shape index: {0}]
  %s5 = inlined_call_operand.vmem [shape: f32[8,128], index: 5, kind: output, shape index: {1}]
  %s6 = inlined_call_operand.vmem [shape: f32[8,128], index: 6, kind: output, shape index: {2}]
  %7 = xla_tuple %s4, %s5, %s6
  %s8 = sld [smem:[#allocation0]]
  $region42: #{forward.3} parent=0
    _
  %s10 = ssub.s32 1, %s8
  %s11 = scalar_select 0, %s10, %s8
  // Predicated region
  $region2: #{forward.3} parent=0 // pred_check
    _
  $region3: #{forward.3} parent=0 // pred_check_branch
    %13 = sbr.rel (0) target = $region5
  $region4: #{forward.3} parent=0 // pred_region
    _
  $region5: #{forward.3} parent=0 // pred_fallthru
    _
  // Predicated region
  $region6: #{forward.3} parent=0 // pred_check
    _
  $region7: #{forward.3} parent=0 // pred_check_branch
    %15 = sbr.rel (0) target = $region9
  $region8: #{forward.3} parent=0 // pred_region
    _
  $region9: #{forward.3} parent=0 // pred_fallthru
    _
  // Predicated region
  $region10: #{forward.3} parent=0 // pred_check
    _
  $region11: #{forward.3} parent=0 // pred_check_branch
    %17 = sbr.rel (0) target = $region13
  $region12: #{forward.3} parent=0 // pred_region
    _
  $region13: #{forward.3} parent=0 // pred_fallthru
    _
  // Predicated region
  $region14: #{forward.3} parent=0 // pred_check
    _
  $region15: #{forward.3} parent=0 // pred_check_branch
    %19 = sbr.rel (0) target = $region17
  $region16: #{forward.3} parent=0 // pred_region
    _
  $region17: #{forward.3} parent=0 // pred_fallthru
    _
  %v21 = vld [vmem:[%s0] sm:$0xf]
  %v22 = vld [vmem:[%s0 + $0x4] sm:$0xf]
  %v23 = vld [vmem:[%s0 + $0x8] sm:$0xf]
  %v24 = vld [vmem:[%s0 + $0xc] sm:$0xf]
  %v25 = vld [vmem:[%s0 + $0x10] sm:$0xf]
  %v26 = vld [vmem:[%s0 + $0x14] sm:$0xf]
  %v27 = vld [vmem:[%s0 + $0x18] sm:$0xf]
  %v28 = vld [vmem:[%s0 + $0x1c] sm:$0xf]
  %v29 = vld [vmem:[%s0 + $0x20] sm:$0xf]
  %v30 = vld [vmem:[%s0 + $0x24] sm:$0xf]
  %v31 = vld [vmem:[%s0 + $0x28] sm:$0xf]
  %v32 = vld [vmem:[%s0 + $0x2c] sm:$0xf]
  %v33 = vld [vmem:[%s0 + $0x30] sm:$0xf]
  %v34 = vld [vmem:[%s0 + $0x34] sm:$0xf]
  %v35 = vld [vmem:[%s0 + $0x38] sm:$0xf]
  %v36 = vld [vmem:[%s0 + $0x3c] sm:$0xf]
  %v37 = vld [vmem:[%s1] sm:$0xf]
  %v38 = vld [vmem:[%s1 + $0x4] sm:$0xf]
  %v39 = vld [vmem:[%s1 + $0x8] sm:$0xf]
  %v40 = vld [vmem:[%s1 + $0xc] sm:$0xf]
  %v41 = vld [vmem:[%s1 + $0x10] sm:$0xf]
  %v42 = vld [vmem:[%s1 + $0x14] sm:$0xf]
  %v43 = vld [vmem:[%s1 + $0x18] sm:$0xf]
  %v44 = vld [vmem:[%s1 + $0x1c] sm:$0xf]
  %v45 = vld [vmem:[%s1 + $0x20] sm:$0xf]
  %v46 = vld [vmem:[%s1 + $0x24] sm:$0xf]
  %v47 = vld [vmem:[%s1 + $0x28] sm:$0xf]
  %v48 = vld [vmem:[%s1 + $0x2c] sm:$0xf]
  %v49 = vld [vmem:[%s1 + $0x30] sm:$0xf]
  %v50 = vld [vmem:[%s1 + $0x34] sm:$0xf]
  %v51 = vld [vmem:[%s1 + $0x38] sm:$0xf]
  %v52 = vld [vmem:[%s1 + $0x3c] sm:$0xf]
  %v53 = vld [vmem:[%s2] sm:$0x1]
  %v55 = vlaneseq
  %v56 = vshrl.u32 %v55, 7
  %v57 = vsub.s32 0, %v56
  %v58 = vrot.slane %v53, %v57
  %v76 = vunpack.c.l.b16 %v21
  %v77 = vunpack.c.l.b16 %v22
  %v78 = vunpack.c.l.b16 %v23
  %v79 = vunpack.c.l.b16 %v24
  %v80 = vunpack.c.l.b16 %v25
  %v81 = vunpack.c.l.b16 %v26
  %v82 = vunpack.c.l.b16 %v27
  %v83 = vunpack.c.l.b16 %v28
  %v84 = vunpack.c.l.b16 %v29
  %v85 = vunpack.c.l.b16 %v30
  %v86 = vunpack.c.l.b16 %v31
  %v87 = vunpack.c.l.b16 %v32
  %v88 = vunpack.c.l.b16 %v33
  %v89 = vunpack.c.l.b16 %v34
  %v90 = vunpack.c.l.b16 %v35
  %v91 = vunpack.c.l.b16 %v36
  %v92 = vpack.c.b16 %v77, %v76
  %v93 = vpack.c.b16 %v79, %v78
  %v94 = vpack.c.b16 %v81, %v80
  %v95 = vpack.c.b16 %v83, %v82
  %v96 = vpack.c.b16 %v85, %v84
  %v97 = vpack.c.b16 %v87, %v86
  %v98 = vpack.c.b16 %v89, %v88
  %v99 = vpack.c.b16 %v91, %v90
  %v124 = vunpack.c.l.b16 %v37
  %v125 = vunpack.c.l.b16 %v38
  %v126 = vunpack.c.l.b16 %v39
  %v127 = vunpack.c.l.b16 %v40
  %v128 = vunpack.c.l.b16 %v41
  %v129 = vunpack.c.l.b16 %v42
  %v130 = vunpack.c.l.b16 %v43
  %v131 = vunpack.c.l.b16 %v44
  %v132 = vunpack.c.l.b16 %v45
  %v133 = vunpack.c.l.b16 %v46
  %v134 = vunpack.c.l.b16 %v47
  %v135 = vunpack.c.l.b16 %v48
  %v136 = vunpack.c.l.b16 %v49
  %v137 = vunpack.c.l.b16 %v50
  %v138 = vunpack.c.l.b16 %v51
  %v139 = vunpack.c.l.b16 %v52
  %v140 = vpack.c.b16 %v125, %v124
  %v141 = vpack.c.b16 %v127, %v126
  %v142 = vpack.c.b16 %v129, %v128
  %v143 = vpack.c.b16 %v131, %v130
  %v144 = vpack.c.b16 %v133, %v132
  %v145 = vpack.c.b16 %v135, %v134
  %v146 = vpack.c.b16 %v137, %v136
  %v147 = vpack.c.b16 %v139, %v138
  %156 = vmatprep.subr.bf16.mxu0 0
  %157 = vmatpush1.bf16.msra.mxu0 %v140
  %158 = vmatprep.subr.bf16.mxu0 0
  %159 = vmatpush1.bf16.msra.mxu0 %v141
  %160 = vmatprep.subr.bf16.mxu0 0
  %161 = vmatpush1.bf16.msra.mxu0 %v142
  %162 = vmatprep.subr.bf16.mxu0 0
  %163 = vmatpush1.bf16.msra.mxu0 %v143
  %164 = vmatprep.subr.bf16.mxu0 0
  %165 = vmatpush1.bf16.msra.mxu0 %v144
  %166 = vmatprep.subr.bf16.mxu0 0
  %167 = vmatpush1.bf16.msra.mxu0 %v145
  %168 = vmatprep.subr.bf16.mxu0 0
  %169 = vmatpush1.bf16.msra.mxu0 %v146
  %170 = vmatprep.subr.bf16.mxu0 0
  %171 = vmatpush1.bf16.msra.mxu0 %v147
  %172 = vmatprep.subr.bf16.mxu0 0
  %173 = vmatpush1.bf16.msra.mxu0 0
  %174 = vmatprep.subr.bf16.mxu0 0
  %175 = vmatpush1.bf16.msra.mxu0 0
  %176 = vmatprep.subr.bf16.mxu0 0
  %177 = vmatpush1.bf16.msra.mxu0 0
  %178 = vmatprep.subr.bf16.mxu0 0
  %179 = vmatpush1.bf16.msra.mxu0 0
  %180 = vmatprep.subr.bf16.mxu0 0
  %181 = vmatpush1.bf16.msra.mxu0 0
  %182 = vmatprep.subr.bf16.mxu0 0
  %183 = vmatpush1.bf16.msra.mxu0 0
  %184 = vmatprep.subr.bf16.mxu0 0
  %185 = vmatpush1.bf16.msra.mxu0 0
  %186 = vmatprep.subr.bf16.mxu0 0
  %187 = vmatpush1.bf16.msra.mxu0 0
  %188 = vmatprep.mubr.bf16.mxu0 0
  %189 = vmatmul.mubr.bf16.gmra.mrb[0].mxu0 %v92
  %v190 = vpop.f32.mrb[0].mxu0
  %v191 = vadd.f32 %v58, %v190
  %v192 = vpop.f32.mrb[0].mxu0
  %v193 = vpop.f32.mrb[0].mxu0
  %v194 = vadd.f32 %v58, %v193
  %v195 = vpop.f32.mrb[0].mxu0
  %196 = vmatprep.mubr.bf16.mxu0 0
  %197 = vmatmul.mubr.bf16.gmra.mrb[0].mxu0 %v93
  %v198 = vpop.f32.mrb[0].mxu0
  %v199 = vadd.f32 %v58, %v198
  %v200 = vpop.f32.mrb[0].mxu0
  %v201 = vpop.f32.mrb[0].mxu0
  %v202 = vadd.f32 %v58, %v201
  %v203 = vpop.f32.mrb[0].mxu0
  %204 = vmatprep.mubr.bf16.mxu0 0
  %205 = vmatmul.mubr.bf16.gmra.mrb[0].mxu0 %v94
  %v206 = vpop.f32.mrb[0].mxu0
  %v207 = vadd.f32 %v58, %v206
  %v208 = vpop.f32.mrb[0].mxu0
  %v209 = vpop.f32.mrb[0].mxu0
  %v210 = vadd.f32 %v58, %v209
  %v211 = vpop.f32.mrb[0].mxu0
  %212 = vmatprep.mubr.bf16.mxu0 0
  %213 = vmatmul.mubr.bf16.gmra.mrb[0].mxu0 %v95
  %v214 = vpop.f32.mrb[0].mxu0
  %v215 = vadd.f32 %v58, %v214
  %v216 = vpop.f32.mrb[0].mxu0
  %v217 = vpop.f32.mrb[0].mxu0
  %v218 = vadd.f32 %v58, %v217
  %v219 = vpop.f32.mrb[0].mxu0
  %220 = vmatprep.mubr.bf16.mxu0 0
  %221 = vmatmul.mubr.bf16.gmra.mrb[0].mxu0 %v96
  %v222 = vpop.f32.mrb[0].mxu0
  %v223 = vadd.f32 %v58, %v222
  %v224 = vpop.f32.mrb[0].mxu0
  %v225 = vpop.f32.mrb[0].mxu0
  %v226 = vadd.f32 %v58, %v225
  %v227 = vpop.f32.mrb[0].mxu0
  %228 = vmatprep.mubr.bf16.mxu0 0
  %229 = vmatmul.mubr.bf16.gmra.mrb[0].mxu0 %v97
  %v230 = vpop.f32.mrb[0].mxu0
  %v231 = vadd.f32 %v58, %v230
  %v232 = vpop.f32.mrb[0].mxu0
  %v233 = vpop.f32.mrb[0].mxu0
  %v234 = vadd.f32 %v58, %v233
  %v235 = vpop.f32.mrb[0].mxu0
  %236 = vmatprep.mubr.bf16.mxu0 0
  %237 = vmatmul.mubr.bf16.gmra.mrb[0].mxu0 %v98
  %v238 = vpop.f32.mrb[0].mxu0
  %v239 = vadd.f32 %v58, %v238
  %v240 = vpop.f32.mrb[0].mxu0
  %v241 = vpop.f32.mrb[0].mxu0
  %v242 = vadd.f32 %v58, %v241
  %v243 = vpop.f32.mrb[0].mxu0
  %244 = vmatprep.mubr.bf16.mxu0 0
  %245 = vmatmul.mubr.bf16.gmra.mrb[0].mxu0 %v99
  %v246 = vpop.f32.mrb[0].mxu0
  %v247 = vadd.f32 %v58, %v246
  %v248 = vpop.f32.mrb[0].mxu0
  %v249 = vpop.f32.mrb[0].mxu0
  %v250 = vadd.f32 %v58, %v249
  %v251 = vpop.f32.mrb[0].mxu0
  %252 = vdwg.mxu0
  %v253 = vpack.c.bf16 %v194, %v191
  %v254 = vpack.c.bf16 %v202, %v199
  %v255 = vpack.c.bf16 %v210, %v207
  %v256 = vpack.c.bf16 %v218, %v215
  %v257 = vpack.c.bf16 %v226, %v223
  %v258 = vpack.c.bf16 %v234, %v231
  %v259 = vpack.c.bf16 %v242, %v239
  %v260 = vpack.c.bf16 %v250, %v247
  %v269 = vunpack.c.l.b16 %v253
  %v270 = vunpack.c.h.b16 %v253
  %v271 = vunpack.c.l.b16 %v254
  %v272 = vunpack.c.h.b16 %v254
  %v273 = vunpack.c.l.b16 %v255
  %v274 = vunpack.c.h.b16 %v255
  %v275 = vunpack.c.l.b16 %v256
  %v276 = vunpack.c.h.b16 %v256
  %v277 = vunpack.c.l.b16 %v257
  %v278 = vunpack.c.h.b16 %v257
  %v279 = vunpack.c.l.b16 %v258
  %v280 = vunpack.c.h.b16 %v258
  %v281 = vunpack.c.l.b16 %v259
  %v282 = vunpack.c.h.b16 %v259
  %v283 = vunpack.c.l.b16 %v260
  %v284 = vunpack.c.h.b16 %v260
  %v285 = vpack.c.b16 %v269, %v269
  %v286 = vpack.c.b16 %v270, %v270
  %v287 = vpack.c.b16 %v271, %v271
  %v288 = vpack.c.b16 %v272, %v272
  %v289 = vpack.c.b16 %v273, %v273
  %v290 = vpack.c.b16 %v274, %v274
  %v291 = vpack.c.b16 %v275, %v275
  %v292 = vpack.c.b16 %v276, %v276
  %v293 = vpack.c.b16 %v277, %v277
  %v294 = vpack.c.b16 %v278, %v278
  %v295 = vpack.c.b16 %v279, %v279
  %v296 = vpack.c.b16 %v280, %v280
  %v297 = vpack.c.b16 %v281, %v281
  %v298 = vpack.c.b16 %v282, %v282
  %v299 = vpack.c.b16 %v283, %v283
  %v300 = vpack.c.b16 %v284, %v284
  %317 = vst [vmem:[%s4] sm:$0xf] %v285
  %318 = vst [vmem:[%s4 + $0x4] sm:$0xf] %v286
  %319 = vst [vmem:[%s4 + $0x8] sm:$0xf] %v287
  %320 = vst [vmem:[%s4 + $0xc] sm:$0xf] %v288
  %321 = vst [vmem:[%s4 + $0x10] sm:$0xf] %v289
  %322 = vst [vmem:[%s4 + $0x14] sm:$0xf] %v290
  %323 = vst [vmem:[%s4 + $0x18] sm:$0xf] %v291
  %324 = vst [vmem:[%s4 + $0x1c] sm:$0xf] %v292
  %325 = vst [vmem:[%s4 + $0x20] sm:$0xf] %v293
  %326 = vst [vmem:[%s4 + $0x24] sm:$0xf] %v294
  %327 = vst [vmem:[%s4 + $0x28] sm:$0xf] %v295
  %328 = vst [vmem:[%s4 + $0x2c] sm:$0xf] %v296
  %329 = vst [vmem:[%s4 + $0x30] sm:$0xf] %v297
  %330 = vst [vmem:[%s4 + $0x34] sm:$0xf] %v298
  %331 = vst [vmem:[%s4 + $0x38] sm:$0xf] %v299
  %332 = vst [vmem:[%s4 + $0x3c] sm:$0xf] %v300
  %v333 = vld [vmem:[%s3] sm:$0x1]
  %v335 = vlaneseq
  %v336 = vshrl.u32 %v335, 7
  %v337 = vsub.s32 0, %v336
  %v338 = vrot.slane %v333, %v337
  %v340 = vld [vmem:[%s4] sm:$0xf]
  %v341 = vld [vmem:[%s4 + $0x4] sm:$0xf]
  %v342 = vunpack.c.l.bf16 %v340
  %v343 = vunpack.c.l.bf16 %v341
  %v344 = vmul.f32 %v338, 0.0
  %v345 = vadd.f32 %v342, %v344
  %v346 = vadd.f32 %v343, %v344
  %v347 = vmax.f32 %v345, 0.0
  %v348 = vmax.f32 %v346, 0.0
  %v349 = vpack.c.bf16 %v348, %v347
  %v351 = vunpack.c.l.b16 %v349
  %v352 = vunpack.c.h.b16 %v349
  %v353 = vpack.c.b16 %v351, %v351
  %v354 = vpack.c.b16 %v352, %v352
  %357 = vst [vmem:[%s4] sm:$0xf] %v353
  %358 = vst [vmem:[%s4 + $0x4] sm:$0xf] %v354
  %v359 = vadd.f32 %v347, 0.0
  %v360 = vadd.f32 %v348, 0.0
  %v361 = vmul.f32 %v347, %v347
  %v362 = vmul.f32 %v348, %v348
  %v363 = vadd.f32 %v361, 0.0
  %v364 = vadd.f32 %v362, 0.0
  %s365 = scalar_lea.vmem %s4, 8
  %v366 = vld [vmem:[%s365] sm:$0xf]
  %v367 = vld [vmem:[%s365 + $0x4] sm:$0xf]
  %v368 = vunpack.c.l.bf16 %v366
  %v369 = vunpack.c.l.bf16 %v367
  %v370 = vmul.f32 %v338, %v347
  %v371 = vmul.f32 %v338, %v348
  %v372 = vadd.f32 %v368, %v370
  %v373 = vadd.f32 %v369, %v371
  %v374 = vmax.f32 %v372, 0.0
  %v375 = vmax.f32 %v373, 0.0
  %v376 = vpack.c.bf16 %v375, %v374
  %v378 = vunpack.c.l.b16 %v376
  %v379 = vunpack.c.h.b16 %v376
  %v380 = vpack.c.b16 %v378, %v378
  %v381 = vpack.c.b16 %v379, %v379
  %384 = vst [vmem:[%s365] sm:$0xf] %v380
  %385 = vst [vmem:[%s365 + $0x4] sm:$0xf] %v381
  %v386 = vadd.f32 %v359, %v374
  %v387 = vadd.f32 %v360, %v375
  %v388 = vmul.f32 %v374, %v374
  %v389 = vmul.f32 %v375, %v375
  %v390 = vadd.f32 %v363, %v388
  %v391 = vadd.f32 %v364, %v389
  %s392 = scalar_lea.vmem %s4, 16
  %v393 = vld [vmem:[%s392] sm:$0xf]
  %v394 = vld [vmem:[%s392 + $0x4] sm:$0xf]
  %v395 = vunpack.c.l.bf16 %v393
  %v396 = vunpack.c.l.bf16 %v394
  %v397 = vmul.f32 %v338, %v374
  %v398 = vmul.f32 %v338, %v375
  %v399 = vadd.f32 %v395, %v397
  %v400 = vadd.f32 %v396, %v398
  %v401 = vmax.f32 %v399, 0.0
  %v402 = vmax.f32 %v400, 0.0
  %v403 = vpack.c.bf16 %v402, %v401
  %v405 = vunpack.c.l.b16 %v403
  %v406 = vunpack.c.h.b16 %v403
  %v407 = vpack.c.b16 %v405, %v405
  %v408 = vpack.c.b16 %v406, %v406
  %411 = vst [vmem:[%s392] sm:$0xf] %v407
  %412 = vst [vmem:[%s392 + $0x4] sm:$0xf] %v408
  %v413 = vadd.f32 %v386, %v401
  %v414 = vadd.f32 %v387, %v402
  %v415 = vmul.f32 %v401, %v401
  %v416 = vmul.f32 %v402, %v402
  %v417 = vadd.f32 %v390, %v415
  %v418 = vadd.f32 %v391, %v416
  %s419 = scalar_lea.vmem %s4, 24
  %v420 = vld [vmem:[%s419] sm:$0xf]
  %v421 = vld [vmem:[%s419 + $0x4] sm:$0xf]
  %v422 = vunpack.c.l.bf16 %v420
  %v423 = vunpack.c.l.bf16 %v421
  %v424 = vmul.f32 %v338, %v401
  %v425 = vmul.f32 %v338, %v402
  %v426 = vadd.f32 %v422, %v424
  %v427 = vadd.f32 %v423, %v425
  %v428 = vmax.f32 %v426, 0.0
  %v429 = vmax.f32 %v427, 0.0
  %v430 = vpack.c.bf16 %v429, %v428
  %v432 = vunpack.c.l.b16 %v430
  %v433 = vunpack.c.h.b16 %v430
  %v434 = vpack.c.b16 %v432, %v432
  %v435 = vpack.c.b16 %v433, %v433
  %438 = vst [vmem:[%s419] sm:$0xf] %v434
  %439 = vst [vmem:[%s419 + $0x4] sm:$0xf] %v435
  %v440 = vadd.f32 %v413, %v428
  %v441 = vadd.f32 %v414, %v429
  %v442 = vmul.f32 %v428, %v428
  %v443 = vmul.f32 %v429, %v429
  %v444 = vadd.f32 %v417, %v442
  %v445 = vadd.f32 %v418, %v443
  %s446 = scalar_lea.vmem %s4, 32
  %v447 = vld [vmem:[%s446] sm:$0xf]
  %v448 = vld [vmem:[%s446 + $0x4] sm:$0xf]
  %v449 = vunpack.c.l.bf16 %v447
  %v450 = vunpack.c.l.bf16 %v448
  %v451 = vmul.f32 %v338, %v428
  %v452 = vmul.f32 %v338, %v429
  %v453 = vadd.f32 %v449, %v451
  %v454 = vadd.f32 %v450, %v452
  %v455 = vmax.f32 %v453, 0.0
  %v456 = vmax.f32 %v454, 0.0
  %v457 = vpack.c.bf16 %v456, %v455
  %v459 = vunpack.c.l.b16 %v457
  %v460 = vunpack.c.h.b16 %v457
  %v461 = vpack.c.b16 %v459, %v459
  %v462 = vpack.c.b16 %v460, %v460
  %465 = vst [vmem:[%s446] sm:$0xf] %v461
  %466 = vst [vmem:[%s446 + $0x4] sm:$0xf] %v462
  %v467 = vadd.f32 %v440, %v455
  %v468 = vadd.f32 %v441, %v456
  %v469 = vmul.f32 %v455, %v455
  %v470 = vmul.f32 %v456, %v456
  %v471 = vadd.f32 %v444, %v469
  %v472 = vadd.f32 %v445, %v470
  %s473 = scalar_lea.vmem %s4, 40
  %v474 = vld [vmem:[%s473] sm:$0xf]
  %v475 = vld [vmem:[%s473 + $0x4] sm:$0xf]
  %v476 = vunpack.c.l.bf16 %v474
  %v477 = vunpack.c.l.bf16 %v475
  %v478 = vmul.f32 %v338, %v455
  %v479 = vmul.f32 %v338, %v456
  %v480 = vadd.f32 %v476, %v478
  %v481 = vadd.f32 %v477, %v479
  %v482 = vmax.f32 %v480, 0.0
  %v483 = vmax.f32 %v481, 0.0
  %v484 = vpack.c.bf16 %v483, %v482
  %v486 = vunpack.c.l.b16 %v484
  %v487 = vunpack.c.h.b16 %v484
  %v488 = vpack.c.b16 %v486, %v486
  %v489 = vpack.c.b16 %v487, %v487
  %492 = vst [vmem:[%s473] sm:$0xf] %v488
  %493 = vst [vmem:[%s473 + $0x4] sm:$0xf] %v489
  %v494 = vadd.f32 %v467, %v482
  %v495 = vadd.f32 %v468, %v483
  %v496 = vmul.f32 %v482, %v482
  %v497 = vmul.f32 %v483, %v483
  %v498 = vadd.f32 %v471, %v496
  %v499 = vadd.f32 %v472, %v497
  %s500 = scalar_lea.vmem %s4, 48
  %v501 = vld [vmem:[%s500] sm:$0xf]
  %v502 = vld [vmem:[%s500 + $0x4] sm:$0xf]
  %v503 = vunpack.c.l.bf16 %v501
  %v504 = vunpack.c.l.bf16 %v502
  %v505 = vmul.f32 %v338, %v482
  %v506 = vmul.f32 %v338, %v483
  %v507 = vadd.f32 %v503, %v505
  %v508 = vadd.f32 %v504, %v506
  %v509 = vmax.f32 %v507, 0.0
  %v510 = vmax.f32 %v508, 0.0
  %v511 = vpack.c.bf16 %v510, %v509
  %v513 = vunpack.c.l.b16 %v511
  %v514 = vunpack.c.h.b16 %v511
  %v515 = vpack.c.b16 %v513, %v513
  %v516 = vpack.c.b16 %v514, %v514
  %519 = vst [vmem:[%s500] sm:$0xf] %v515
  %520 = vst [vmem:[%s500 + $0x4] sm:$0xf] %v516
  %v521 = vadd.f32 %v494, %v509
  %v522 = vadd.f32 %v495, %v510
  %v523 = vmul.f32 %v509, %v509
  %v524 = vmul.f32 %v510, %v510
  %v525 = vadd.f32 %v498, %v523
  %v526 = vadd.f32 %v499, %v524
  %s527 = scalar_lea.vmem %s4, 56
  %v528 = vld [vmem:[%s527] sm:$0xf]
  %v529 = vld [vmem:[%s527 + $0x4] sm:$0xf]
  %v530 = vunpack.c.l.bf16 %v528
  %v531 = vunpack.c.l.bf16 %v529
  %v532 = vmul.f32 %v338, %v509
  %v533 = vmul.f32 %v338, %v510
  %v534 = vadd.f32 %v530, %v532
  %v535 = vadd.f32 %v531, %v533
  %v536 = vmax.f32 %v534, 0.0
  %v537 = vmax.f32 %v535, 0.0
  %v538 = vpack.c.bf16 %v537, %v536
  %v540 = vunpack.c.l.b16 %v538
  %v541 = vunpack.c.h.b16 %v538
  %v542 = vpack.c.b16 %v540, %v540
  %v543 = vpack.c.b16 %v541, %v541
  %546 = vst [vmem:[%s527] sm:$0xf] %v542
  %547 = vst [vmem:[%s527 + $0x4] sm:$0xf] %v543
  %v548 = vadd.f32 %v521, %v536
  %v549 = vadd.f32 %v522, %v537
  %v550 = vmul.f32 %v536, %v536
  %v551 = vmul.f32 %v537, %v537
  %v552 = vadd.f32 %v525, %v550
  %v553 = vadd.f32 %v526, %v551
  %v554 = vlaneseq
  %v555 = vshrl.u32 %v554, 7
  %v556 = vadd.s32 %v555, 8
  %s557 = smul.u32 0, 16
  %v558 = vstv %s557
  %v559 = vadd.s32 %v555, %v558
  %v560 = vadd.s32 %v556, %v558
  %vm561 = vcmp.lt.s32.totalorder %v559, 2
  %vm562 = vcmp.lt.s32.totalorder %v560, 2
  %v563 = vsel %vm561, 1, 0
  %v564 = vsel %vm562, 1, 0
  %v565 = vcvt.s32.f32 %v563
  %v566 = vcvt.s32.f32 %v564
  %v567 = vmul.f32 %v548, %v565
  %v568 = vmul.f32 %v549, %v566
  %v569 = vadd.f32 %v567, %v568
  %v570 = vrot.slane %v569, 4
  %v571 = vadd.f32 %v569, %v570
  %v572 = vrot.slane %v571, 2
  %v573 = vadd.f32 %v571, %v572
  %v574 = vrot.slane %v573, 1
  %v575 = vadd.f32 %v573, %v574
  %v576 = vmul.f32 %v552, %v565
  %v577 = vmul.f32 %v553, %v566
  %v578 = vadd.f32 %v576, %v577
  %v579 = vrot.slane %v578, 4
  %v580 = vadd.f32 %v578, %v579
  %v581 = vrot.slane %v580, 2
  %v582 = vadd.f32 %v580, %v581
  %v583 = vrot.slane %v582, 1
  %v584 = vadd.f32 %v582, %v583
  %585 = vst [vmem:[%s5] sm:$0xff] %v575
  %586 = vst [vmem:[%s6] sm:$0xff] %v584
  // Predicated region
  $region18: #{forward.3} parent=0 // pred_check
    _
  $region19: #{forward.3} parent=0 // pred_check_branch
    %588 = sbr.rel (0) target = $region21
  $region20: #{forward.3} parent=0 // pred_region
    _
  $region21: #{forward.3} parent=0 // pred_fallthru
    _
  // Predicated region
  $region22: #{forward.3} parent=0 // pred_check
    _
  $region23: #{forward.3} parent=0 // pred_check_branch
    %590 = sbr.rel (0) target = $region25
  $region24: #{forward.3} parent=0 // pred_region
    _
  $region25: #{forward.3} parent=0 // pred_fallthru
    _
  // Predicated region
  $region26: #{forward.3} parent=0 // pred_check
    _
  $region27: #{forward.3} parent=0 // pred_check_branch
    %592 = sbr.rel (0) target = $region29
  $region28: #{forward.3} parent=0 // pred_region
    _
  $region29: #{forward.3} parent=0 // pred_fallthru
    _
  // Predicated region
  $region30: #{forward.3} parent=0 // pred_check
    _
  $region31: #{forward.3} parent=0 // pred_check_branch
    %594 = sbr.rel (0) target = $region33
  $region32: #{forward.3} parent=0 // pred_region
    _
  $region33: #{forward.3} parent=0 // pred_fallthru
    _
  // Predicated region
  $region34: #{forward.3} parent=0 // pred_check
    _
  $region35: #{forward.3} parent=0 // pred_check_branch
    %596 = sbr.rel (0) target = $region37
  $region36: #{forward.3} parent=0 // pred_region
    _
  $region37: #{forward.3} parent=0 // pred_fallthru
    _
  // Predicated region
  $region38: #{forward.3} parent=0 // pred_check
    _
  $region39: #{forward.3} parent=0 // pred_check_branch
    %598 = sbr.rel (0) target = $region41
  $region40: #{forward.3} parent=0 // pred_region
    _
  $region41: #{forward.3} parent=0 // pred_fallthru
    _

</llo_original>
